<compile_context>
chip_gen: v7x
topology: tpu7x:2x2x1
jax: 0.10.0
libtpu: 0.0.40
codegen_flags: <defaults>
</compile_context>

<pallas_src>
import jax
import jax.numpy as jnp
from jax import lax
from jax.experimental import pallas as pl
from jax.experimental.pallas import tpu as pltpu


_LANE_CANDIDATES = (1024, 512, 256, 128)
_BLOCK_BYTES_TARGET = 8 * 1024 * 1024   # per-input HBM block (review: 4-8 MiB)
_INNER_CHUNK_BYTES = 2 * 1024 * 1024    # per-chunk f32 compute footprint
_VMEM_LIMIT_CAP = 48 * 1024 * 1024      # v7x-safe scoped-VMEM cap (64 MiB/TC phys.)


def _sublane_multiple(dtype):
    return {4: 8, 2: 16, 1: 32}.get(jnp.dtype(dtype).itemsize, 8)


def _make_mae_kernel(*, rows, row_tile, inner_rows, n_inner,
                     blocks_per_split, needs_mask):
    """All arguments are static Python ints/bools baked into the kernel."""

    def kernel(r_ref, x_ref, o_ref, acc_ref):
        # acc_ref: VMEM (8, lanes) f32 accumulator carried across the inner
        # ("arbitrary") grid axis; re-initialized at the start of each split.
        @pl.when(pl.program_id(1) == 0)
        def _init():
            acc_ref[...] = jnp.zeros_like(acc_ref)

        lanes = acc_ref.shape[1]
        blk = pl.program_id(0) * blocks_per_split + pl.program_id(1)

        def chunk_abs_diff(start_row, nrows):
            r = r_ref[pl.ds(start_row, nrows), :].astype(jnp.float32)
            t = x_ref[pl.ds(start_row, nrows), :].astype(jnp.float32)
            ad = jnp.abs(r - t)
            if needs_mask:
                # Zero rows past the logical end (partial tail block and/or the
                # phantom block of an odd 2-way split). All-true for full
                # blocks, so applying it everywhere is correct; it is cheap VPU
                # work hidden under the DMA. Keep the where form (safe even if
                # the unspecified rows contain NaN/Inf).
                row_ids = (blk * row_tile + start_row
                           + lax.broadcasted_iota(jnp.int32, ad.shape, 0))
                ad = jnp.where(row_ids < rows, ad, 0.0)
            return ad

        if inner_rows % 8 == 0:
            # Stream the block in f32 chunks of inner_rows rows so compiler
            # temporaries stay small; pure VPU adds into the (8, lanes) acc.
            @pl.loop(0, n_inner)
            def _(c):
                start = pl.multiple_of(c * inner_rows, inner_rows)
                ad = chunk_abs_diff(start, inner_rows)
                # (inner_rows, lanes) -> (inner_rows//8, 8, lanes) regroups
                # whole sublane tiles; the axis-0 sum is elementwise vreg adds.
                acc_ref[...] += ad.reshape(-1, 8, lanes).sum(axis=0)
        else:
            # Tiny single block whose row count is not a multiple of 8
            # (only happens when nblocks == 1 and rows < one inner chunk).
            ad = chunk_abs_diff(0, inner_rows)
            acc_ref[0:1, :] += jnp.sum(ad, axis=0, keepdims=True)

        # Single cross-lane/sublane reduce + SMEM scalar write per split.
        @pl.when(pl.program_id(1) == pl.num_programs(1) - 1)
        def _finalize():
            o_ref[0, 0] = jnp.sum(acc_ref[...])

    return kernel


def mae_loss(recon_x, x, feature_dim=None, *,
             block_bytes=_BLOCK_BYTES_TARGET,
             inner_bytes=_INNER_CHUNK_BYTES,
             core_parallel=False):
    """Sum of absolute differences over all elements (see module docstring)."""
    del feature_dim  # full-sum reduction is layout independent; kept for API parity
    assert recon_x.shape == x.shape, (recon_x.shape, x.shape)

    flat_r = recon_x.reshape(-1)   # free reshape (contiguous)
    flat_x = x.reshape(-1)
    total = int(flat_r.shape[0])

    if total == 0:
        return jnp.float32(0.0)

    if total % 128 != 0:
        # TODO(synk): totals not divisible by 128 cannot be viewed as a
        # lane-aligned 2D array without a full pad copy (2x HBM traffic on a
        # bandwidth-bound kernel); a manual-DMA 1D Pallas path would be needed.
        # Use a single-pass XLA reduction instead (same 1x HBM traffic).
        return jnp.sum(jnp.abs(flat_r.astype(jnp.float32) -
                               flat_x.astype(jnp.float32)))

    # Largest lane width (multiple of 128) dividing the total -> lane-dense rows.
    lanes = 128
    for cand in _LANE_CANDIDATES:
        if total % cand == 0:
            lanes = cand
            break
    rows = total // lanes
    r2 = flat_r.reshape(rows, lanes)   # free reshapes, lane-dense layout
    x2 = flat_x.reshape(rows, lanes)

    itemsize = jnp.dtype(r2.dtype).itemsize
    sub = _sublane_multiple(r2.dtype)

    # Inner chunk: rows per in-kernel step (~inner_bytes of f32 compute),
    # rounded to the dtype's sublane granularity.
    inner_rows = max(sub, (inner_bytes // (lanes * 4)) // sub * sub)
    # HBM block: rows per grid step (~block_bytes of input dtype), a multiple
    # of inner_rows so the in-kernel loop tiles it exactly.
    target_rows = max(inner_rows,
                      (block_bytes // (lanes * itemsize)) // inner_rows * inner_rows)

    if rows >= inner_rows:
        row_tile = min(target_rows, (rows // inner_rows) * inner_rows)
    else:
        row_tile = rows                 # single tiny block (== full dim, legal)
    inner_rows = min(inner_rows, row_tile)
    n_inner = row_tile // inner_rows

    nblocks = pl.cdiv(rows, row_tile)
    # Always split the block range in two when possible so a 2-TensorCore part
    # (v7x) can use both HBM paths; harmless (sequential) on single-core chips.
    num_splits = 2 if nblocks >= 2 else 1
    blocks_per_split = pl.cdiv(nblocks, num_splits)
    has_phantom = num_splits * blocks_per_split != nblocks
    needs_mask = (rows % row_tile != 0) or has_phantom

    if has_phantom:
        # Clamp the phantom block of the second split onto a valid block so its
        # DMA stays in bounds; the in-kernel row mask zeroes its contribution.
        in_map = lambda s, i: (jnp.minimum(s * blocks_per_split + i, nblocks - 1), 0)
    else:
        in_map = lambda s, i: (s * blocks_per_split + i, 0)

    kernel = _make_mae_kernel(rows=rows, row_tile=row_tile,
                              inner_rows=inner_rows, n_inner=n_inner,
                              blocks_per_split=blocks_per_split,
                              needs_mask=needs_mask)

    # 2 inputs x 2 pipeline buffers x block, plus in-kernel f32 temporaries for
    # one chunk and the accumulator; capped for v7x's 64 MiB/TC VMEM.
    # (pl.Buffered(3) on the inputs is a possible few-% v7x win but would push
    # the footprint toward the cap, so we keep the default double buffering.)
    vmem_limit = (2 * 2 * row_tile * lanes * itemsize
                  + 6 * inner_rows * lanes * 4
                  + 8 * lanes * 4 + (1 << 20))
    vmem_limit = int(min(max(vmem_limit, 4 << 20), _VMEM_LIMIT_CAP))

    # TODO(synk): on v7x, call with core_parallel=True so the leading axis uses
    # pltpu.CORE_PARALLEL and the two splits land on both TensorCores.
    lead_sem = pltpu.CORE_PARALLEL if core_parallel else "parallel"

    partial_sums = pl.pallas_call(
        kernel,
        out_shape=jax.ShapeDtypeStruct((num_splits, 1), jnp.float32),
        grid_spec=pltpu.PrefetchScalarGridSpec(
            num_scalar_prefetch=0,
            grid=(num_splits, blocks_per_split),
            in_specs=[
                pl.BlockSpec((row_tile, lanes), in_map),
                pl.BlockSpec((row_tile, lanes), in_map),
            ],
            out_specs=pl.BlockSpec(
                (1, 1), lambda s, i: (s, 0),
                memory_space=pltpu.MemorySpace.SMEM),
            scratch_shapes=[pltpu.VMEM((8, lanes), jnp.float32)],
        ),
        compiler_params=pltpu.CompilerParams(
            dimension_semantics=(lead_sem, "arbitrary"),
            vmem_limit_bytes=vmem_limit,
        ),
    )(r2, x2)

    return jnp.sum(partial_sums)


if __name__ == "__main__":
    key = jax.random.PRNGKey(0)
    k1, k2, k3, k4, k5, k6 = jax.random.split(key, 6)

    # --- Test 1: small shape consistent with the module (NCHW, feature_dim=W).
    batch, channels, h, w = 2, 4, 16, 16
    feature_dim = w
    recon_x = jax.random.normal(k1, (batch, channels, h, w), dtype=jnp.float32)
    x = jax.random.normal(k2, (batch, channels, h, w), dtype=jnp.float32)
    loss = jax.block_until_ready(mae_loss(recon_x, x, feature_dim))
    ref = jnp.sum(jnp.abs(recon_x - x))
    assert jnp.allclose(loss, ref, rtol=1e-5, atol=1e-3), (loss, ref)

    # --- Test 2: exercises the multi-block grid, the always-2-way split with a
    # clamped phantom block (odd block count), the partial tail-row mask, and
    # the in-kernel chunk loop (small block/inner sizes force all paths).
    r_b = jax.random.normal(k3, (4, 10, 104, 128), dtype=jnp.float32)
    x_b = jax.random.normal(k4, (4, 10, 104, 128), dtype=jnp.float32)
    loss_b = jax.block_until_ready(
        mae_loss(r_b, x_b, 128, block_bytes=256 * 1024, inner_bytes=64 * 1024))
    ref_b = jnp.sum(jnp.abs(r_b - x_b))
    assert jnp.allclose(loss_b, ref_b, rtol=1e-4, atol=1e-1), (loss_b, ref_b)

    # --- Test 3: bf16 inputs -> (16,128)-legal tiling, 2 B/elem streaming,
    # f32 accumulation, multi-block grid + 2 splits.
    r_c = jax.random.normal(k5, (2, 8, 32, 128), dtype=jnp.bfloat16)
    x_c = jax.random.normal(k6, (2, 8, 32, 128), dtype=jnp.bfloat16)
    loss_c = jax.block_until_ready(
        mae_loss(r_c, x_c, 128, block_bytes=64 * 1024, inner_bytes=64 * 1024))
    ref_c = jnp.sum(jnp.abs(r_c.astype(jnp.float32) - x_c.astype(jnp.float32)))
    assert jnp.allclose(loss_c, ref_c, rtol=1e-3, atol=1e-1), (loss_c, ref_c)

    print("KERNEL_OK")
</pallas_src>

<mosaic_0001>
module attributes {stable_mosaic.version = 11 : i64} {
  func.func @kernel(%arg0: i32, %arg1: i32, %arg2: memref<2x1024xf32, #tpu.memory_space<vmem>>, %arg3: memref<2x1024xf32, #tpu.memory_space<vmem>>, %arg4: memref<1x1xf32, #tpu.memory_space<smem>>, %arg5: memref<8x1024xf32, #tpu.memory_space<vmem>>) attributes {dimension_semantics = [#tpu.dimension_semantics<parallel>, #tpu.dimension_semantics<arbitrary>], iteration_bounds = array<i64: 1, 1>, scalar_prefetch = 0 : i64, scratch_operands = 1 : i64, tpu.core_type = #tpu.core_type<tc>, window_params = [{transform_indices = @transform_0, window_bounds = array<i64: 2, 1024>}, {transform_indices = @transform_1, window_bounds = array<i64: 2, 1024>}, {transform_indices = @transform_2, window_bounds = array<i64: 1, 1>}]} {
    %c0_i32 = arith.constant 0 : i32
    %0 = arith.cmpi eq, %arg1, %c0_i32 : i32
    %1 = arith.extui %0 : i1 to i32
    %c0_i32_0 = arith.constant 0 : i32
    %2 = arith.cmpi ne, %1, %c0_i32_0 : i32
    scf.if %2 {
      %cst_10 = arith.constant 0.000000e+00 : f32
      %15 = vector.broadcast %cst_10 : f32 to vector<8x1024xf32>
      %c0_11 = arith.constant 0 : index
      %c0_12 = arith.constant 0 : index
      %16 = vector.load %arg5[%c0_11, %c0_12] : memref<8x1024xf32, #tpu.memory_space<vmem>>, vector<8x1024xf32>
      tpu.vector_store %arg5[%c0_11, %c0_12], %15 {strides = array<i32>} : memref<8x1024xf32, #tpu.memory_space<vmem>>, vector<8x1024xf32>,
    } else {
    }
    %c0 = arith.constant 0 : index
    %c0_1 = arith.constant 0 : index
    %3 = vector.load %arg2[%c0, %c0_1] : memref<2x1024xf32, #tpu.memory_space<vmem>>, vector<2x1024xf32>
    %c0_2 = arith.constant 0 : index
    %c0_3 = arith.constant 0 : index
    %4 = vector.load %arg3[%c0_2, %c0_3] : memref<2x1024xf32, #tpu.memory_space<vmem>>, vector<2x1024xf32>
    %5 = arith.subf %3, %4 : vector<2x1024xf32>
    %6 = math.absf %5 : vector<2x1024xf32>
    %c0_4 = arith.constant 0 : index
    %c0_5 = arith.constant 0 : index
    %7 = vector.load %arg5[%c0_4, %c0_5] : memref<8x1024xf32, #tpu.memory_space<vmem>>, vector<1x1024xf32>
    %cst = arith.constant dense<0.000000e+00> : vector<1024xf32>
    %8 = vector.multi_reduction <add>, %6, %cst [0] : vector<2x1024xf32> to vector<1024xf32>
    %9 = vector.shape_cast %8 : vector<1024xf32> to vector<1x1024xf32>
    %10 = arith.addf %7, %9 : vector<1x1024xf32>
    %c0_6 = arith.constant 0 : index
    %c0_7 = arith.constant 0 : index
    %11 = vector.load %arg5[%c0_6, %c0_7] : memref<8x1024xf32, #tpu.memory_space<vmem>>, vector<1x1024xf32>
    tpu.vector_store %arg5[%c0_6, %c0_7], %10 {strides = array<i32>} : memref<8x1024xf32, #tpu.memory_space<vmem>>, vector<1x1024xf32>,
    %c0_i32_8 = arith.constant 0 : i32
    %12 = arith.cmpi eq, %arg1, %c0_i32_8 : i32
    %13 = arith.extui %12 : i1 to i32
    %c0_i32_9 = arith.constant 0 : i32
    %14 = arith.cmpi ne, %13, %c0_i32_9 : i32
    scf.if %14 {
      %c0_10 = arith.constant 0 : index
      %c0_11 = arith.constant 0 : index
      %15 = vector.load %arg5[%c0_10, %c0_11] : memref<8x1024xf32, #tpu.memory_space<vmem>>, vector<8x1024xf32>
      %16 = vector.shape_cast %15 : vector<8x1024xf32> to vector<1x8x1024xf32>
      %cst_12 = arith.constant dense<0.000000e+00> : vector<1xf32>
      %17 = vector.multi_reduction <add>, %16, %cst_12 [1, 2] : vector<1x8x1024xf32> to vector<1xf32>
      %18 = vector.shape_cast %17 : vector<1xf32> to vector<1x1x1xf32>
      %19 = vector.extract %18[0, 0, 0] : f32 from vector<1x1x1xf32>
      %c0_13 = arith.constant 0 : index
      %c0_14 = arith.constant 0 : index
      %20 = memref.load %arg4[%c0_13, %c0_14] : memref<1x1xf32, #tpu.memory_space<smem>>
      memref.store %19, %arg4[%c0_13, %c0_14] : memref<1x1xf32, #tpu.memory_space<smem>>
    } else {
    }
    return
  }
  func.func @transform_0(%arg0: i32, %arg1: i32) -> (i32, i32) {
    %c1_i32 = arith.constant 1 : i32
    %0 = arith.muli %arg0, %c1_i32 : i32
    %1 = arith.addi %0, %arg1 : i32
    %c0_i32 = arith.constant 0 : i32
    %c0_i32_0 = arith.constant 0 : i32
    return %1, %c0_i32 : i32, i32
  }
  func.func @transform_1(%arg0: i32, %arg1: i32) -> (i32, i32) {
    %c1_i32 = arith.constant 1 : i32
    %0 = arith.muli %arg0, %c1_i32 : i32
    %1 = arith.addi %0, %arg1 : i32
    %c0_i32 = arith.constant 0 : i32
    %c0_i32_0 = arith.constant 0 : i32
    return %1, %c0_i32 : i32, i32
  }
  func.func @transform_2(%arg0: i32, %arg1: i32) -> (i32, i32) {
    %c0_i32 = arith.constant 0 : i32
    %c0_i32_0 = arith.constant 0 : i32
    return %arg0, %c0_i32 : i32, i32
  }
}

</mosaic_0001>

<llo_original>
// kernel: tpu_custom_call.1
$region0: #{tpu_custom_call.1}
  #allocation0 [shape = 'u32[]', space=smem, size = 0x4, offset = 0x4, fixed_abs, tag = 'smem constant byte address 0x4 - core index']
  #allocation1 [shape = 'u32[144,128]{1,0:T(1,128)}', space=vmem, size = 0x12000, scoped, tag = 'internal scratch']
  #allocation2 [shape = 'f32[8,1024]{1,0:T(8,128)}', space=vmem, size = 0x8000, scoped, tag = 'scratch operand']
  %s0 = inlined_call_operand.hbm [shape: f32[2,1024], index: 0, kind: input, shape index: {}]
  %s1 = inlined_call_operand.hbm [shape: f32[2,1024], index: 1, kind: input, shape index: {}]
  %s2 = inlined_call_operand.hbm [shape: f32[1,1], index: 2, kind: output, shape index: {}]
  %s3 = sld [smem:[#allocation0]]
  $region34: #{tpu_custom_call.1} parent=0
    _
  %s5 = ssub.s32 1, %s3
  %s6 = scalar_select 0, %s5, %s3
  $region1: #{tpu_custom_call.1} parent=0
    #allocation3 [shape = 'u8[8192]{0}', space=vmem, size = 0x2000, scoped, tag = 'input window, operand 0, single buffered']
    #allocation4 [shape = 's32[1]{0}', space=sflag, size = 0x4, scoped, tag = 'scoped memory for tpu_custom_call.1']
    #allocation5 [shape = 's32[1]{0}', space=sflag, size = 0x4, scoped, tag = 'scoped memory for tpu_custom_call.1']
    #allocation6 [shape = 'u8[8192]{0}', space=vmem, size = 0x2000, scoped, tag = 'input window, operand 1, single buffered']
    #allocation7 [shape = 's32[1]{0}', space=sflag, size = 0x4, scoped, tag = 'scoped memory for tpu_custom_call.1']
    #allocation8 [shape = 'u8[512]{0}', space=smem, size = 0x200, scoped, tag = 'output window, operand 0, single buffered']
    %7 = vsyncpa [#allocation4], 0
    %8 = vsyncpa [#allocation7], 0
    %9 = vsyncpa [#allocation5], 0
    // Predicated region
    $region2: #{tpu_custom_call.1} parent=1 // pred_check
      _
    $region3: #{tpu_custom_call.1} parent=1 // pred_check_branch
      %11 = sbr.rel (0) target = $region5
    $region4: #{tpu_custom_call.1} parent=1 // pred_region
      %s12 = sadd.s32 0, 0
      %s14 = ssub.s32 256, 256
      %15 = vsyncadd [#allocation4], %s14
      %s16 = smul.addr %s12, 8
      %s17 = smul.addr %s16, 32
      %s18 = scalar_lea.hbm %s0, %s17
      %s20 = sshll.u32 [#allocation3], 4
      %s21 = int_to_ptr.vmem [resolvable:$true] %s20
      %23 = dma.hbm_to_vmem [thread:$0]  %s18, 256, %s21, [#allocation4]
    $region5: #{tpu_custom_call.1} parent=1 // pred_fallthru
      _
    // Predicated region
    $region6: #{tpu_custom_call.1} parent=1 // pred_check
      _
    $region7: #{tpu_custom_call.1} parent=1 // pred_check_branch
      %25 = sbr.rel (0) target = $region9
    $region8: #{tpu_custom_call.1} parent=1 // pred_region
      %s26 = sadd.s32 0, 0
      %s28 = ssub.s32 256, 256
      %29 = vsyncadd [#allocation7], %s28
      %s30 = smul.addr %s26, 8
      %s31 = smul.addr %s30, 32
      %s32 = scalar_lea.hbm %s1, %s31
      %s34 = sshll.u32 [#allocation6], 4
      %s35 = int_to_ptr.vmem [resolvable:$true] %s34
      %37 = dma.hbm_to_vmem [thread:$0]  %s32, 256, %s35, [#allocation7]
    $region9: #{tpu_custom_call.1} parent=1 // pred_fallthru
      _
    // Predicated region
    $region10: #{tpu_custom_call.1} parent=1 // pred_check
      _
    $region11: #{tpu_custom_call.1} parent=1 // pred_check_branch
      %39 = sbr.rel (0) target = $region13
    $region12: #{tpu_custom_call.1} parent=1 // pred_region
      %40 = dma.done [#allocation4], 256
    $region13: #{tpu_custom_call.1} parent=1 // pred_fallthru
      _
    // Predicated region
    $region14: #{tpu_custom_call.1} parent=1 // pred_check
      _
    $region15: #{tpu_custom_call.1} parent=1 // pred_check_branch
      %42 = sbr.rel (0) target = $region17
    $region16: #{tpu_custom_call.1} parent=1 // pred_region
      %43 = dma.done [#allocation7], 256
    $region17: #{tpu_custom_call.1} parent=1 // pred_fallthru
      _
    %s44 = sadd.s32 0, 0
    %s45 = sadd.s32 0, 0
    %p46 = scmp.eq.s32.totalorder 0, 0
    // Predicated region
    $region18: #{tpu_custom_call.1} parent=1 // pred_check
      %p47 = pneg %p46
    $region19: #{tpu_custom_call.1} parent=1 // pred_check_branch
      %49 = sbr.rel (%p47) target = $region21
    $region20: #{tpu_custom_call.1} parent=1 // pred_region
      %50 = vst [vmem:[#allocation2] sm:$0xff] 0.0
      %51 = vst [vmem:[#allocation2 + $0x8] sm:$0xff] 0.0
      %52 = vst [vmem:[#allocation2 + $0x10] sm:$0xff] 0.0
      %53 = vst [vmem:[#allocation2 + $0x18] sm:$0xff] 0.0
      %54 = vst [vmem:[#allocation2 + $0x20] sm:$0xff] 0.0
      %55 = vst [vmem:[#allocation2 + $0x28] sm:$0xff] 0.0
      %56 = vst [vmem:[#allocation2 + $0x30] sm:$0xff] 0.0
      %57 = vst [vmem:[#allocation2 + $0x38] sm:$0xff] 0.0
    $region21: #{tpu_custom_call.1} parent=1 // pred_fallthru
      _
    %v58 = vld [vmem:[#allocation3] sm:$0xff]
    %v59 = vld [vmem:[#allocation3 + $0x8] sm:$0xff]
    %v60 = vld [vmem:[#allocation6] sm:$0xff]
    %v61 = vld [vmem:[#allocation6 + $0x8] sm:$0xff]
    %v62 = vsub.f32 %v58, %v60
    %v63 = vsub.f32 %v59, %v61
    %v64 = vand.u32 2147483647, %v62
    %v65 = vand.u32 2147483647, %v63
    %v66 = vld [vmem:[#allocation2] ss:$8 sm:$0xf]
    %v67 = vld [vmem:[#allocation2] ss:$8 sm:$0xf0]
    %v68 = vor.u32 %v66, %v67
    %v71 = vcombine.high %v64, %v64
    %v73 = vunpack.c.l.s4 1983009808
    %v74 = vunpack.c.0.s8 %v73
    %v75 = vlaneseq
    %v76 = vshrl.u32 %v75, 7
    %v77 = vsub.s32 %v74, %v76
    %v78 = vrot.slane %v64, %v77
    %v80 = vunpack.c.l.s4 1983009808
    %v81 = vunpack.c.0.s8 %v80
    %v82 = vlaneseq
    %v83 = vshrl.u32 %v82, 7
    %v84 = vsub.s32 %v81, %v83
    %v85 = vrot.slane %v71, %v84
    %v86 = vcombine.high %v78, %v78
    %v87 = vcombine.high %v85, %v85
    %v88 = vcombine.high %v65, %v65
    %v90 = vunpack.c.l.s4 1983009808
    %v91 = vunpack.c.0.s8 %v90
    %v92 = vlaneseq
    %v93 = vshrl.u32 %v92, 7
    %v94 = vsub.s32 %v91, %v93
    %v95 = vrot.slane %v65, %v94
    %v97 = vunpack.c.l.s4 1983009808
    %v98 = vunpack.c.0.s8 %v97
    %v99 = vlaneseq
    %v100 = vshrl.u32 %v99, 7
    %v101 = vsub.s32 %v98, %v100
    %v102 = vrot.slane %v88, %v101
    %v103 = vcombine.high %v95, %v95
    %v104 = vcombine.high %v102, %v102
    %vm113 = vcmask 1041408
    %v114 = vsel %vm113, %v78, 0.0
    %v115 = vrot.slane %v114, 4
    %v116 = vadd.f32 %v114, %v115
    %v117 = vrot.slane %v116, 2
    %v118 = vadd.f32 %v116, %v117
    %v119 = vrot.slane %v118, 1
    %v120 = vadd.f32 %v118, %v119
    %v121 = vsel %vm113, %v86, 0.0
    %v122 = vrot.slane %v121, 4
    %v123 = vadd.f32 %v121, %v122
    %v124 = vrot.slane %v123, 2
    %v125 = vadd.f32 %v123, %v124
    %v126 = vrot.slane %v125, 1
    %v127 = vadd.f32 %v125, %v126
    %v128 = vsel %vm113, %v85, 0.0
    %v129 = vrot.slane %v128, 4
    %v130 = vadd.f32 %v128, %v129
    %v131 = vrot.slane %v130, 2
    %v132 = vadd.f32 %v130, %v131
    %v133 = vrot.slane %v132, 1
    %v134 = vadd.f32 %v132, %v133
    %v135 = vsel %vm113, %v87, 0.0
    %v136 = vrot.slane %v135, 4
    %v137 = vadd.f32 %v135, %v136
    %v138 = vrot.slane %v137, 2
    %v139 = vadd.f32 %v137, %v138
    %v140 = vrot.slane %v139, 1
    %v141 = vadd.f32 %v139, %v140
    %v142 = vsel %vm113, %v95, 0.0
    %v143 = vrot.slane %v142, 4
    %v144 = vadd.f32 %v142, %v143
    %v145 = vrot.slane %v144, 2
    %v146 = vadd.f32 %v144, %v145
    %v147 = vrot.slane %v146, 1
    %v148 = vadd.f32 %v146, %v147
    %v149 = vsel %vm113, %v103, 0.0
    %v150 = vrot.slane %v149, 4
    %v151 = vadd.f32 %v149, %v150
    %v152 = vrot.slane %v151, 2
    %v153 = vadd.f32 %v151, %v152
    %v154 = vrot.slane %v153, 1
    %v155 = vadd.f32 %v153, %v154
    %v156 = vsel %vm113, %v102, 0.0
    %v157 = vrot.slane %v156, 4
    %v158 = vadd.f32 %v156, %v157
    %v159 = vrot.slane %v158, 2
    %v160 = vadd.f32 %v158, %v159
    %v161 = vrot.slane %v160, 1
    %v162 = vadd.f32 %v160, %v161
    %v163 = vsel %vm113, %v104, 0.0
    %v164 = vrot.slane %v163, 4
    %v165 = vadd.f32 %v163, %v164
    %v166 = vrot.slane %v165, 2
    %v167 = vadd.f32 %v165, %v166
    %v168 = vrot.slane %v167, 1
    %v169 = vadd.f32 %v167, %v168
    %v178 = vcombine.low %v120, %v127
    %v179 = vcombine.low %v134, %v141
    %v180 = vcombine.low %v148, %v155
    %v181 = vcombine.low %v162, %v169
    %v183 = vunpack.c.l.s4 1966171168
    %v184 = vunpack.c.0.s8 %v183
    %v185 = vlaneseq
    %v186 = vshrl.u32 %v185, 7
    %v187 = vsub.s32 %v184, %v186
    %v188 = vrot.slane %v178, %v187
    %v190 = vunpack.c.l.s4 1966171168
    %v191 = vunpack.c.0.s8 %v190
    %v192 = vlaneseq
    %v193 = vshrl.u32 %v192, 7
    %v194 = vsub.s32 %v191, %v193
    %v195 = vrot.slane %v179, %v194
    %v197 = vunpack.c.l.s4 1966171168
    %v198 = vunpack.c.0.s8 %v197
    %v199 = vlaneseq
    %v200 = vshrl.u32 %v199, 7
    %v201 = vsub.s32 %v198, %v200
    %v202 = vrot.slane %v180, %v201
    %v204 = vunpack.c.l.s4 1966171168
    %v205 = vunpack.c.0.s8 %v204
    %v206 = vlaneseq
    %v207 = vshrl.u32 %v206, 7
    %v208 = vsub.s32 %v205, %v207
    %v209 = vrot.slane %v181, %v208
    %v210 = vcombine.low %v188, %v195
    %v211 = vcombine.low %v202, %v209
    %v213 = vunpack.c.l.s4 1966171168
    %v214 = vunpack.c.0.s8 %v213
    %v215 = vlaneseq
    %v216 = vshrl.u32 %v215, 7
    %v217 = vsub.s32 %v214, %v216
    %v218 = vrot.slane %v210, %v217
    %v220 = vunpack.c.l.s4 1966171168
    %v221 = vunpack.c.0.s8 %v220
    %v222 = vlaneseq
    %v223 = vshrl.u32 %v222, 7
    %v224 = vsub.s32 %v221, %v223
    %v225 = vrot.slane %v211, %v224
    %v226 = vcombine.low %v218, %v225
    %v228 = vadd.f32 %v68, %v226
    %229 = vst [vmem:[#allocation2] ss:$8 sm:$0xf] %v228
    %230 = vst [vmem:[#allocation2] ss:$8 sm:$0xf0] %v228
    // Predicated region
    $region22: #{tpu_custom_call.1} parent=1 // pred_check
      %p231 = pneg %p46
    $region23: #{tpu_custom_call.1} parent=1 // pred_check_branch
      %233 = sbr.rel (%p231) target = $region25
    $region24: #{tpu_custom_call.1} parent=1 // pred_region
      %v234 = vld [vmem:[#allocation2] sm:$0xff]
      %v235 = vld [vmem:[#allocation2 + $0x8] sm:$0xff]
      %v236 = vld [vmem:[#allocation2 + $0x10] sm:$0xff]
      %v237 = vld [vmem:[#allocation2 + $0x18] sm:$0xff]
      %v238 = vld [vmem:[#allocation2 + $0x20] sm:$0xff]
      %v239 = vld [vmem:[#allocation2 + $0x28] sm:$0xff]
      %v240 = vld [vmem:[#allocation2 + $0x30] sm:$0xff]
      %v241 = vld [vmem:[#allocation2 + $0x38] sm:$0xff]
      %v242 = vadd.f32 %v234, %v235
      %v243 = vadd.f32 %v242, %v236
      %v244 = vadd.f32 %v243, %v237
      %v245 = vadd.f32 %v244, %v238
      %v246 = vadd.f32 %v245, %v239
      %v247 = vadd.f32 %v246, %v240
      %v248 = vadd.f32 %v247, %v241
      %249 = vadd.xlane.f32.xlu0 %v248
      %v250 = vpop.xlane.xlu0 %249
      %v251 = vrot.slane %v250, 4
      %v252 = vadd.f32 %v250, %v251
      %v253 = vrot.slane %v252, 2
      %v254 = vadd.f32 %v252, %v253
      %v255 = vrot.slane %v254, 1
      %v256 = vadd.f32 %v254, %v255
      %s257 = vtos %v256
      %s258 = scalar_lea.smem [#allocation8], 0
      %259 = sst [smem:[%s258]] %s257
    $region25: #{tpu_custom_call.1} parent=1 // pred_fallthru
      _
    // Predicated region
    $region26: #{tpu_custom_call.1} parent=1 // pred_check
      _
    $region27: #{tpu_custom_call.1} parent=1 // pred_check_branch
      %261 = sbr.rel (0) target = $region29
    $region28: #{tpu_custom_call.1} parent=1 // pred_region
      %s263 = ssub.s32 16, 16
      %264 = vsyncadd [#allocation5], %s263
      %267 = dma.smem_to_hbm [#allocation8], 16, %s2, [#allocation5]
    $region29: #{tpu_custom_call.1} parent=1 // pred_fallthru
      _
    // Predicated region
    $region30: #{tpu_custom_call.1} parent=1 // pred_check
      _
    $region31: #{tpu_custom_call.1} parent=1 // pred_check_branch
      %269 = sbr.rel (0) target = $region33
    $region32: #{tpu_custom_call.1} parent=1 // pred_region
      %270 = dma.done [#allocation5], 16
    $region33: #{tpu_custom_call.1} parent=1 // pred_fallthru
      _
    %271 = sfence
    %272 = vsyncpa [#allocation4], 1
    %273 = vsyncpa [#allocation7], 1
    %274 = vsyncpa [#allocation5], 1

</llo_original>
